<compile_context>
chip_gen: v7x
topology: tpu7x:2x2x1
jax: 0.10.0
libtpu: 0.0.40
codegen_flags: <defaults>
</compile_context>

<pallas_src>
import functools

import jax
import jax.numpy as jnp
from jax import lax
from jax.experimental import pallas as pl
from jax.experimental.pallas import tpu as pltpu


def _bert_embed_kernel(ids_ref, tts_ref, word_hbm, pos_ref, tok_ref,
                       gamma_ref, beta_ref, out_ref, gbuf, sem, *,
                       eps, type_vocab, rows, seq_len, hidden):
    # ids_ref  : (B*S,)  int32 token ids in SMEM (scalar prefetch)
    # tts_ref  : (rows, 1) int32 token-type ids for this tile
    # word_hbm : (vocab, H) word table, raw HBM ref (no auto-DMA)
    # pos_ref  : (S, H)   resident position table (first S rows)
    # tok_ref  : (type_vocab, H) resident token-type table
    # gamma/beta: (1, H)  resident LayerNorm params
    # gbuf     : (rows, H) VMEM gather buffer, sem: DMA semaphore (1,)
    base = pl.program_id(0) * rows

    # ---- In-kernel word-embedding gather: one row DMA per token, all in flight ----
    def _issue(r, carry):
        row_id = ids_ref[base + r]
        pltpu.make_async_copy(word_hbm.at[pl.ds(row_id, 1), :],
                              gbuf.at[pl.ds(r, 1), :],
                              sem.at[0]).start()
        return carry

    lax.fori_loop(0, rows, _issue, 0)

    def _drain(r, carry):
        # Same-shaped descriptor on the same semaphore: one wait per issued copy.
        pltpu.make_async_copy(word_hbm.at[pl.ds(0, 1), :],
                              gbuf.at[pl.ds(0, 1), :],
                              sem.at[0]).wait()
        return carry

    lax.fori_loop(0, rows, _drain, 0)

    x = gbuf[...].astype(jnp.float32)                          # (rows, H)

    # ---- Position embeddings from the resident (S, H) table (fetched once) -------
    if rows % seq_len == 0:
        # Tile spans whole sequences: repeat the full table reps times.
        reps = rows // seq_len
        pos = pos_ref[...].astype(jnp.float32)                 # (S, H)
        x = (x.reshape(reps, seq_len, hidden) + pos[None, :, :]).reshape(rows, hidden)
    else:
        # rows < S and S % rows == 0: contiguous slice, never wraps.
        p0 = base % seq_len
        if rows % 8 == 0 and seq_len % 8 == 0:
            p0 = pl.multiple_of(p0, 8)
        x = x + pos_ref[pl.ds(p0, rows), :].astype(jnp.float32)

    # ---- Token-type embeddings: masked sum over the tiny resident table ----------
    tts = tts_ref[...]                                         # (rows, 1) int32
    for v in range(type_vocab):                                # static, usually 2
        row = tok_ref[v:v + 1, :].astype(jnp.float32)          # (1, H)
        x = x + (tts == v).astype(jnp.float32) * row           # (rows,1)*(1,H)->(rows,H)

    # ---- LayerNorm: single-pass stats in f32, scale/shift, cast on store ----------
    inv_h = 1.0 / float(hidden)
    mean = jnp.sum(x, axis=-1, keepdims=True) * inv_h
    ex2 = jnp.sum(x * x, axis=-1, keepdims=True) * inv_h
    var = ex2 - mean * mean
    inv = lax.rsqrt(var + eps)
    gamma = gamma_ref[...].astype(jnp.float32)                 # (1, H)
    beta = beta_ref[...].astype(jnp.float32)
    out_ref[...] = ((x - mean) * inv * gamma + beta).astype(out_ref.dtype)
    # TODO(synk): dropout is identity here (inference / eval mode); training mode
    # would use pltpu.prng_seed + pltpu.stateful_bernoulli per tile.


def _pick_row_tile(total_rows, seq_len, hidden):
    """Largest legal row tile <= ~2 MiB of f32 work (and <= 1024 rows)."""
    target = max(8, min(1024, (2 << 20) // max(1, hidden * 4)))
    cands = set()
    for d in range(8, seq_len + 1, 8):                 # divisors of S, multiples of 8
        if seq_len % d == 0 and total_rows % d == 0:
            cands.add(d)
    k = 1
    while k * seq_len <= total_rows:                   # multiples of S
        r = k * seq_len
        if total_rows % r == 0 and (r % 8 == 0 or r == total_rows):
            cands.add(r)
        k += 1
    cands.add(total_rows)
    fitting = [c for c in cands if c <= target]
    return max(fitting) if fitting else min(cands)


def bert_embeddings(input_ids, token_type_ids, word_table, pos_table, tok_table,
                    ln_weight, ln_bias, *, eps=1e-12, row_tile=None, out_dtype=None):
    # TODO(synk): inputs_embeds override and custom position_ids / past-length offset
    # are not supported; only the module's default path (arange positions) is fused.
    B, S = input_ids.shape
    H = word_table.shape[1]
    type_vocab = tok_table.shape[0]
    total = B * S

    if token_type_ids is None:
        token_type_ids = jnp.zeros((B, S), dtype=jnp.int32)

    out_dtype = out_dtype or word_table.dtype
    R = row_tile if row_tile is not None else _pick_row_tile(total, S, H)
    assert total % R == 0, "row tile must divide batch*seq"
    assert (S % R == 0) or (R % S == 0), "row tile must divide S or be a multiple of S"
    assert (R % 8 == 0) or (R == total), "row tile must be 8-aligned"

    flat_ids = input_ids.reshape(total).astype(jnp.int32)
    tts2 = token_type_ids.reshape(total, 1).astype(jnp.int32)
    pos_slab = pos_table[:S]                                   # (S, H), resident
    gamma2 = ln_weight.reshape(1, H)
    beta2 = ln_bias.reshape(1, H)

    tbytes = jnp.dtype(word_table.dtype).itemsize
    obytes = jnp.dtype(out_dtype).itemsize
    est = (2 * R * H * obytes + 2 * R * 4 + 2 * S * H * tbytes
           + 2 * type_vocab * H * tbytes + 4 * H * 4
           + R * H * tbytes + 6 * R * H * 4)
    vmem_limit = int(min(48 * (1 << 20), max(32 * (1 << 20), est)))

    grid_spec = pltpu.PrefetchScalarGridSpec(
        num_scalar_prefetch=1,
        grid=(total // R,),
        in_specs=[
            pl.BlockSpec((R, 1), lambda i, ids: (i, 0)),           # token-type ids
            pl.BlockSpec(memory_space=pl.ANY),                     # word table in HBM
            pl.BlockSpec((S, H), lambda i, ids: (0, 0)),           # resident pos table
            pl.BlockSpec((type_vocab, H), lambda i, ids: (0, 0)),  # resident tok table
            pl.BlockSpec((1, H), lambda i, ids: (0, 0)),           # resident gamma
            pl.BlockSpec((1, H), lambda i, ids: (0, 0)),           # resident beta
        ],
        out_specs=pl.BlockSpec((R, H), lambda i, ids: (i, 0)),
        scratch_shapes=[
            pltpu.VMEM((R, H), word_table.dtype),                  # gather buffer
            pltpu.SemaphoreType.DMA((1,)),
        ],
    )

    out = pl.pallas_call(
        functools.partial(_bert_embed_kernel, eps=eps, type_vocab=type_vocab,
                          rows=R, seq_len=S, hidden=H),
        grid_spec=grid_spec,
        out_shape=jax.ShapeDtypeStruct((total, H), out_dtype),
        compiler_params=pltpu.CompilerParams(
            dimension_semantics=("parallel",),
            vmem_limit_bytes=vmem_limit),
    )(flat_ids, tts2, word_table, pos_slab, tok_table, gamma2, beta2)
    return out.reshape(B, S, H)


def _reference(input_ids, token_type_ids, word_table, pos_table, tok_table,
               ln_weight, ln_bias, eps):
    B, S = input_ids.shape
    pos_ids = jnp.broadcast_to(jnp.arange(S), (B, S))
    x = (word_table[input_ids].astype(jnp.float32)
         + pos_table[pos_ids].astype(jnp.float32)
         + tok_table[token_type_ids].astype(jnp.float32))
    mean = jnp.mean(x, axis=-1, keepdims=True)
    var = jnp.mean((x - mean) ** 2, axis=-1, keepdims=True)
    return (x - mean) * lax.rsqrt(var + eps) * ln_weight + ln_bias


if __name__ == "__main__":
    # Small, deterministic config.
    B, S, H = 2, 32, 128
    VOCAB, MAX_POS, TYPE_VOCAB = 64, 64, 2
    EPS = 1e-12

    key = jax.random.PRNGKey(0)
    k_word, k_pos, k_tok, k_g, k_b, k_ids, k_tt = jax.random.split(key, 7)

    word_table = 0.02 * jax.random.normal(k_word, (VOCAB, H), dtype=jnp.float32)
    word_table = word_table.at[0].set(0.0)     # padding_idx=0 init convention
    pos_table = 0.02 * jax.random.normal(k_pos, (MAX_POS, H), dtype=jnp.float32)
    tok_table = 0.02 * jax.random.normal(k_tok, (TYPE_VOCAB, H), dtype=jnp.float32)
    ln_weight = 1.0 + 0.01 * jax.random.normal(k_g, (H,), dtype=jnp.float32)
    ln_bias = 0.01 * jax.random.normal(k_b, (H,), dtype=jnp.float32)

    input_ids = jax.random.randint(k_ids, (B, S), 0, VOCAB, dtype=jnp.int32)
    token_type_ids = jax.random.randint(k_tt, (B, S), 0, TYPE_VOCAB, dtype=jnp.int32)

    ref = _reference(input_ids, token_type_ids, word_table, pos_table, tok_table,
                     ln_weight, ln_bias, EPS)

    # Exercise both position paths: R < S (contiguous slice, grid of 4 tiles) and
    # R = 2*S (repeat path), plus the automatic tile picker.
    for rt in (16, 64, None):
        out = bert_embeddings(input_ids, token_type_ids, word_table, pos_table,
                              tok_table, ln_weight, ln_bias, eps=EPS, row_tile=rt)
        out = jax.block_until_ready(out)
        assert out.shape == (B, S, H)
        err = float(jnp.max(jnp.abs(out.astype(jnp.float32) - ref)))
        assert err < 5e-4, f"mismatch vs reference (row_tile={rt}): {err}"

    print("KERNEL_OK")
</pallas_src>

<mosaic_0001>
module attributes {stable_mosaic.version = 11 : i64} {
  func.func @_bert_embed_kernel(%arg0: i32, %arg1: memref<64xi32, #tpu.memory_space<smem>>, %arg2: memref<16x1xi32, #tpu.memory_space<vmem>>, %arg3: memref<64x128xf32, #tpu.memory_space<any>>, %arg4: memref<32x128xf32, #tpu.memory_space<vmem>>, %arg5: memref<2x128xf32, #tpu.memory_space<vmem>>, %arg6: memref<1x128xf32, #tpu.memory_space<vmem>>, %arg7: memref<1x128xf32, #tpu.memory_space<vmem>>, %arg8: memref<16x128xf32, #tpu.memory_space<vmem>>, %arg9: memref<16x128xf32, #tpu.memory_space<vmem>>, %arg10: memref<1x!tpu.dma_semaphore, #tpu.memory_space<semaphore_mem>>) attributes {dimension_semantics = [#tpu.dimension_semantics<parallel>], iteration_bounds = array<i64: 4>, scalar_prefetch = 1 : i64, scratch_operands = 2 : i64, tpu.core_type = #tpu.core_type<tc>, window_params = [{transform_indices = @transform_0, window_bounds = array<i64: 16, 1>}, {}, {pipeline_mode = #tpu.pipeline_mode<synchronous>, transform_indices = @transform_2, window_bounds = array<i64: 32, 128>}, {pipeline_mode = #tpu.pipeline_mode<synchronous>, transform_indices = @transform_3, window_bounds = array<i64: 2, 128>}, {pipeline_mode = #tpu.pipeline_mode<synchronous>, transform_indices = @transform_4, window_bounds = array<i64: 1, 128>}, {pipeline_mode = #tpu.pipeline_mode<synchronous>, transform_indices = @transform_5, window_bounds = array<i64: 1, 128>}, {transform_indices = @transform_6, window_bounds = array<i64: 16, 128>}]} {
    %c16_i32 = arith.constant 16 : i32
    %0 = arith.muli %arg0, %c16_i32 : i32
    %c0_i32 = arith.constant 0 : i32
    %c16_i32_0 = arith.constant 16 : i32
    %1 = arith.addi %c0_i32, %c16_i32_0 : i32
    %c1_i32 = arith.constant 1 : i32
    scf.for %arg11 = %c0_i32 to %1 step %c1_i32  : i32 {
      %62 = arith.addi %0, %arg11 : i32
      %63 = arith.index_cast %62 : i32 to index
      %64 = memref.load %arg1[%63] : memref<64xi32, #tpu.memory_space<smem>>
      %c0_i32_29 = arith.constant 0 : i32
      %c0_i32_30 = arith.constant 0 : i32
      %65 = tpu.memref_slice %arg3[%64, %c0_i32_30] : memref<64x128xf32, #tpu.memory_space<any>> -> memref<1x128xf32, #tpu.memory_space<any>>
      %c0_i32_31 = arith.constant 0 : i32
      %66 = tpu.memref_slice %arg9[%arg11, %c0_i32_31] : memref<16x128xf32, #tpu.memory_space<vmem>> -> memref<1x128xf32, #tpu.memory_space<vmem>>
      %67 = tpu.memref_slice %arg10[%c0_i32_29] : memref<1x!tpu.dma_semaphore, #tpu.memory_space<semaphore_mem>> -> memref<1x!tpu.dma_semaphore, #tpu.memory_space<semaphore_mem>>
      %68 = tpu.memref_squeeze %67 : memref<1x!tpu.dma_semaphore, #tpu.memory_space<semaphore_mem>> -> memref<!tpu.dma_semaphore, #tpu.memory_space<semaphore_mem>>
      tpu.enqueue_dma source(%65 : memref<1x128xf32, #tpu.memory_space<any>>) target(%66 : memref<1x128xf32, #tpu.memory_space<vmem>>) target_semaphore(%68 : memref<!tpu.dma_semaphore, #tpu.memory_space<semaphore_mem>>)
    }
    %c16_i32_1 = arith.constant 16 : i32
    %c0_i32_2 = arith.constant 0 : i32
    %c16_i32_3 = arith.constant 16 : i32
    %2 = arith.addi %c0_i32_2, %c16_i32_3 : i32
    %c1_i32_4 = arith.constant 1 : i32
    scf.for %arg11 = %c0_i32_2 to %2 step %c1_i32_4  : i32 {
      %c0_i32_29 = arith.constant 0 : i32
      %c0_i32_30 = arith.constant 0 : i32
      %c0_i32_31 = arith.constant 0 : i32
      %62 = tpu.memref_slice %arg3[%c0_i32_30, %c0_i32_31] : memref<64x128xf32, #tpu.memory_space<any>> -> memref<1x128xf32, #tpu.memory_space<any>>
      %c0_i32_32 = arith.constant 0 : i32
      %c0_i32_33 = arith.constant 0 : i32
      %63 = tpu.memref_slice %arg9[%c0_i32_32, %c0_i32_33] : memref<16x128xf32, #tpu.memory_space<vmem>> -> memref<1x128xf32, #tpu.memory_space<vmem>>
      %64 = tpu.memref_slice %arg10[%c0_i32_29] : memref<1x!tpu.dma_semaphore, #tpu.memory_space<semaphore_mem>> -> memref<1x!tpu.dma_semaphore, #tpu.memory_space<semaphore_mem>>
      %65 = tpu.memref_squeeze %64 : memref<1x!tpu.dma_semaphore, #tpu.memory_space<semaphore_mem>> -> memref<!tpu.dma_semaphore, #tpu.memory_space<semaphore_mem>>
      tpu.wait_dma2 semaphore(%65 : memref<!tpu.dma_semaphore, #tpu.memory_space<semaphore_mem>>) src(%62 : memref<1x128xf32, #tpu.memory_space<any>>) dst(%63 : memref<1x128xf32, #tpu.memory_space<vmem>>)
    }
    %c0 = arith.constant 0 : index
    %c0_5 = arith.constant 0 : index
    %3 = vector.load %arg9[%c0, %c0_5] : memref<16x128xf32, #tpu.memory_space<vmem>>, vector<16x128xf32>
    %c32_i32 = arith.constant 32 : i32
    %c0_i32_6 = arith.constant 0 : i32
    %4 = arith.cmpi eq, %c32_i32, %c0_i32_6 : i32
    %c1_i32_7 = arith.constant 1 : i32
    %5 = arith.select %4, %c1_i32_7, %c32_i32 : i32
    %6 = arith.remsi %0, %5 : i32
    %c0_i32_8 = arith.constant 0 : i32
    %7 = arith.cmpi ne, %6, %c0_i32_8 : i32
    %c0_i32_9 = arith.constant 0 : i32
    %8 = arith.cmpi slt, %6, %c0_i32_9 : i32
    %c0_i32_10 = arith.constant 0 : i32
    %9 = arith.cmpi slt, %5, %c0_i32_10 : i32
    %10 = arith.xori %8, %9 : i1
    %11 = arith.andi %10, %7 : i1
    %12 = arith.addi %6, %5 : i32
    %13 = arith.select %11, %12, %6 : i32
    %14 = tpu.assume_multiple %13, 8 : i32
    %15 = arith.index_cast %14 : i32 to index
    %c0_11 = arith.constant 0 : index
    %16 = vector.load %arg4[%15, %c0_11] : memref<32x128xf32, #tpu.memory_space<vmem>>, vector<16x128xf32>
    %17 = arith.addf %3, %16 : vector<16x128xf32>
    %c0_12 = arith.constant 0 : index
    %c0_13 = arith.constant 0 : index
    %18 = vector.load %arg2[%c0_12, %c0_13] : memref<16x1xi32, #tpu.memory_space<vmem>>, vector<16x1xi32>
    %c0_14 = arith.constant 0 : index
    %c0_15 = arith.constant 0 : index
    %19 = vector.load %arg5[%c0_14, %c0_15] : memref<2x128xf32, #tpu.memory_space<vmem>>, vector<1x128xf32>
    %c0_i32_16 = arith.constant 0 : i32
    %20 = vector.broadcast %c0_i32_16 : i32 to vector<16x1xi32>
    %21 = arith.cmpi eq, %18, %20 : vector<16x1xi32>
    %22 = arith.extui %21 : vector<16x1xi1> to vector<16x1xi32>
    %23 = arith.sitofp %22 : vector<16x1xi32> to vector<16x1xf32>
    %24 = vector.broadcast %23 : vector<16x1xf32> to vector<16x128xf32>
    %25 = vector.broadcast %19 : vector<1x128xf32> to vector<16x128xf32>
    %26 = arith.mulf %24, %25 : vector<16x128xf32>
    %27 = arith.addf %17, %26 : vector<16x128xf32>
    %c1 = arith.constant 1 : index
    %c0_17 = arith.constant 0 : index
    %28 = vector.load %arg5[%c1, %c0_17] : memref<2x128xf32, #tpu.memory_space<vmem>>, vector<1x128xf32>
    %c1_i32_18 = arith.constant 1 : i32
    %29 = vector.broadcast %c1_i32_18 : i32 to vector<16x1xi32>
    %30 = arith.cmpi eq, %18, %29 : vector<16x1xi32>
    %31 = arith.extui %30 : vector<16x1xi1> to vector<16x1xi32>
    %32 = arith.sitofp %31 : vector<16x1xi32> to vector<16x1xf32>
    %33 = vector.broadcast %32 : vector<16x1xf32> to vector<16x128xf32>
    %34 = vector.broadcast %28 : vector<1x128xf32> to vector<16x128xf32>
    %35 = arith.mulf %33, %34 : vector<16x128xf32>
    %36 = arith.addf %27, %35 : vector<16x128xf32>
    %cst = arith.constant dense<0.000000e+00> : vector<16xf32>
    %37 = vector.multi_reduction <add>, %36, %cst [1] : vector<16x128xf32> to vector<16xf32>
    %38 = vector.shape_cast %37 : vector<16xf32> to vector<16x1xf32>
    %cst_19 = arith.constant 7.812500e-03 : f32
    %39 = vector.broadcast %cst_19 : f32 to vector<16x1xf32>
    %40 = arith.mulf %38, %39 : vector<16x1xf32>
    %41 = arith.mulf %36, %36 : vector<16x128xf32>
    %cst_20 = arith.constant dense<0.000000e+00> : vector<16xf32>
    %42 = vector.multi_reduction <add>, %41, %cst_20 [1] : vector<16x128xf32> to vector<16xf32>
    %43 = vector.shape_cast %42 : vector<16xf32> to vector<16x1xf32>
    %cst_21 = arith.constant 7.812500e-03 : f32
    %44 = vector.broadcast %cst_21 : f32 to vector<16x1xf32>
    %45 = arith.mulf %43, %44 : vector<16x1xf32>
    %46 = arith.mulf %40, %40 : vector<16x1xf32>
    %47 = arith.subf %45, %46 : vector<16x1xf32>
    %cst_22 = arith.constant 9.99999996E-13 : f32
    %48 = vector.broadcast %cst_22 : f32 to vector<16x1xf32>
    %49 = arith.addf %47, %48 : vector<16x1xf32>
    %50 = math.rsqrt %49 : vector<16x1xf32>
    %c0_23 = arith.constant 0 : index
    %c0_24 = arith.constant 0 : index
    %51 = vector.load %arg6[%c0_23, %c0_24] : memref<1x128xf32, #tpu.memory_space<vmem>>, vector<1x128xf32>
    %c0_25 = arith.constant 0 : index
    %c0_26 = arith.constant 0 : index
    %52 = vector.load %arg7[%c0_25, %c0_26] : memref<1x128xf32, #tpu.memory_space<vmem>>, vector<1x128xf32>
    %53 = vector.broadcast %40 : vector<16x1xf32> to vector<16x128xf32>
    %54 = arith.subf %36, %53 : vector<16x128xf32>
    %55 = vector.broadcast %50 : vector<16x1xf32> to vector<16x128xf32>
    %56 = arith.mulf %54, %55 : vector<16x128xf32>
    %57 = vector.broadcast %51 : vector<1x128xf32> to vector<16x128xf32>
    %58 = arith.mulf %56, %57 : vector<16x128xf32>
    %59 = vector.broadcast %52 : vector<1x128xf32> to vector<16x128xf32>
    %60 = arith.addf %58, %59 : vector<16x128xf32>
    %c0_27 = arith.constant 0 : index
    %c0_28 = arith.constant 0 : index
    %61 = vector.load %arg8[%c0_27, %c0_28] : memref<16x128xf32, #tpu.memory_space<vmem>>, vector<16x128xf32>
    tpu.vector_store %arg8[%c0_27, %c0_28], %60 {strides = array<i32>} : memref<16x128xf32, #tpu.memory_space<vmem>>, vector<16x128xf32>,
    return
  }
  func.func @transform_0(%arg0: i32, %arg1: memref<64xi32, #tpu.memory_space<smem>>) -> (i32, i32) {
    %c0_i32 = arith.constant 0 : i32
    %c0_i32_0 = arith.constant 0 : i32
    return %arg0, %c0_i32 : i32, i32
  }
  func.func @transform_2(%arg0: i32, %arg1: memref<64xi32, #tpu.memory_space<smem>>) -> (i32, i32) {
    %c0_i32 = arith.constant 0 : i32
    %c0_i32_0 = arith.constant 0 : i32
    %c0_i32_1 = arith.constant 0 : i32
    return %c0_i32, %c0_i32_0 : i32, i32
  }
  func.func @transform_3(%arg0: i32, %arg1: memref<64xi32, #tpu.memory_space<smem>>) -> (i32, i32) {
    %c0_i32 = arith.constant 0 : i32
    %c0_i32_0 = arith.constant 0 : i32
    %c0_i32_1 = arith.constant 0 : i32
    return %c0_i32, %c0_i32_0 : i32, i32
  }
  func.func @transform_4(%arg0: i32, %arg1: memref<64xi32, #tpu.memory_space<smem>>) -> (i32, i32) {
    %c0_i32 = arith.constant 0 : i32
    %c0_i32_0 = arith.constant 0 : i32
    %c0_i32_1 = arith.constant 0 : i32
    return %c0_i32, %c0_i32_0 : i32, i32
  }
  func.func @transform_5(%arg0: i32, %arg1: memref<64xi32, #tpu.memory_space<smem>>) -> (i32, i32) {
    %c0_i32 = arith.constant 0 : i32
    %c0_i32_0 = arith.constant 0 : i32
    %c0_i32_1 = arith.constant 0 : i32
    return %c0_i32, %c0_i32_0 : i32, i32
  }
  func.func @transform_6(%arg0: i32, %arg1: memref<64xi32, #tpu.memory_space<smem>>) -> (i32, i32) {
    %c0_i32 = arith.constant 0 : i32
    %c0_i32_0 = arith.constant 0 : i32
    return %arg0, %c0_i32 : i32, i32
  }
}

</mosaic_0001>

<llo_original>
// kernel: tpu_custom_call.1
$region0: #{tpu_custom_call.1}
  #allocation0 [shape = 'u32[]', space=smem, size = 0x4, offset = 0x4, fixed_abs, tag = 'smem constant byte address 0x4 - core index']
  #allocation1 [shape = 'u32[144,128]{1,0:T(1,128)}', space=vmem, size = 0x12000, scoped, tag = 'internal scratch']
  #allocation2 [shape = 'f32[16,128]{1,0:T(8,128)}', space=vmem, size = 0x2000, scoped, tag = 'scratch operand']
  #allocation3 [shape = 's32[1]{0}', space=sflag, size = 0x4, scoped, tag = 'scratch operand']
  #allocation4 [shape = 's32[1]{0}', space=sflag, size = 0x4, scoped, tag = 'scoped memory for tpu_custom_call.1']
  #allocation5 [shape = 'u8[512]{0}', space=smem, size = 0x200, scoped, tag = 'prefetched SMEM operand 0']
  #allocation10 [shape = 's32[]', space=sflag, size = 0x4, offset = 0, fixed_abs, tag = 'sflag constant byte address 0x0 - dummy sync flag']
  %s0 = inlined_call_operand.vmem [shape: s32[64], index: 0, kind: input, shape index: {}]
  %s1 = inlined_call_operand.vmem [shape: s32[64,1], index: 1, kind: input, shape index: {}]
  %s2 = inlined_call_operand.vmem [shape: f32[64,128], index: 2, kind: input, shape index: {}]
  %s3 = inlined_call_operand.hbm [shape: f32[32,128], index: 3, kind: input, shape index: {}]
  %s4 = inlined_call_operand.vmem [shape: f32[2,128], index: 4, kind: input, shape index: {}]
  %s5 = inlined_call_operand.vmem [shape: f32[1,128], index: 5, kind: input, shape index: {}]
  %s6 = inlined_call_operand.vmem [shape: f32[1,128], index: 6, kind: input, shape index: {}]
  %s7 = inlined_call_operand.hbm [shape: f32[64,128], index: 7, kind: output, shape index: {}]
  %s8 = sld [smem:[#allocation0]]
  $region101: #{tpu_custom_call.1} parent=0
    _
  %s10 = ssub.s32 1, %s8
  %s11 = scalar_select 0, %s10, %s8
  %s12 = sshll.u32 %s0, 4
  %s13 = int_to_ptr.vmem [resolvable:$true] %s12
  %15 = dma.vmem_to_smem %s13, 16, [#allocation5], [#allocation4]
  %16 = dma.done [#allocation4], 16
  %17 = sfence
  $region1: #{tpu_custom_call.1} parent=0
    #allocation6 [shape = 'u8[16384]{0}', space=vmem, size = 0x4000, scoped, tag = 'input window, operand 3, single buffered']
    #allocation7 [shape = 's32[2]{0}', space=sflag, size = 0x8, scoped, tag = 'scoped memory for tpu_custom_call.1']
    #allocation8 [shape = 's32[2]{0}', space=sflag, size = 0x8, scoped, tag = 'scoped memory for tpu_custom_call.1']
    #allocation9 [shape = 'u8[16384]{0}', space=vmem, size = 0x4000, scoped, tag = 'output window, operand 0']
    %18 = vsyncpa [#allocation7], 0
    %19 = vsyncpa [#allocation8], 0
    %s20 = scalar_lea.sflag [#allocation8], 1
    %21 = vsyncpa %s20, 0
    loop: start=0, step=1, limit=6
    $region2: #{tpu_custom_call.1} parent=1 // loop_pre_header
      _
    $region3: #{tpu_custom_call.1} parent=1 // loop_header
      %s23 = sphi 0, %s27
      %p24 = scmp.ge.s32.totalorder %s23, 6
      %s33 = sphi 0, %s35
      %s36 = sphi 0, %s33
      %s37 = sphi 0, %s36
      %s53 = sphi 0, %s37
      %s57 = sphi 0, %s57
      %s59 = sphi 0, %s57
      %s60 = sphi 0, %s59
      %s74 = sphi 0, %s60
      %s78 = sphi 0, %s78
      %s80 = sphi 0, %s78
      %s81 = sphi 0, %s80
      %s95 = sphi 0, %s81
      %s99 = sphi 0, %s99
      %s101 = sphi 0, %s99
      %s102 = sphi 0, %s101
      %s116 = sphi 0, %s102
      %s120 = sphi 0, %s120
      %s122 = sphi 0, %s120
      %s123 = sphi 0, %s122
      %s137 = sphi 0, %s123
      %s143 = sphi 0, %s145
      %s146 = sphi 0, %s143
      %s147 = sphi 0, %s146
      %s163 = sphi 0, %s147
    $region4: #{tpu_custom_call.1} parent=1 // loop_header_branch
      %26 = sbr.rel (%p24) target = $region8
    $region5: #{tpu_custom_call.1} parent=1 // loop_body
      %s28 = ssub.s32 %s23, 1
      %s29 = ssub.s32 %s23, 2
      %s30 = sadd.s32 %s23, 1
      %s31 = ssub.s32 %s23, %s30
      %p32 = scmp.eq.s32.totalorder %s31, 0
      %s34 = sadd.s32 %s33, 1
      %s35 = scalar_select %p32, %s33, %s34
      %p38 = pneg %p32
      %p39 = scmp.eq.s32.totalorder %s23, 3
      %p40 = por %p38, %p39
      %p41 = scmp.ne.s32.totalorder %s33, %s36
      %p42 = scmp.eq.s32.totalorder %s23, 0
      %p43 = por %p41, %p42
      %p44 = scmp.ne.s32.totalorder %s33, %s36
      %p45 = scmp.eq.s32.totalorder %s28, 3
      %p46 = por %p44, %p45
      %p47 = scmp.ne.s32.totalorder %s36, %s37
      %p48 = scmp.eq.s32.totalorder %s28, 0
      %p49 = por %p47, %p48
      %p50 = scmp.ne.s32.totalorder %s36, %s37
      %p51 = scmp.eq.s32.totalorder %s29, 3
      %p52 = por %p50, %p51
      %p54 = scmp.ne.s32.totalorder %s37, %s53
      %p55 = scmp.eq.s32.totalorder %s29, 0
      %p56 = por %p54, %p55
      %s58 = sadd.s32 %s57, 1
      %p61 = scmp.eq.s32.totalorder %s23, 3
      %p62 = scmp.ne.s32.totalorder %s57, %s59
      %p63 = scmp.eq.s32.totalorder %s23, 0
      %p64 = por %p62, %p63
      %p65 = scmp.ne.s32.totalorder %s57, %s59
      %p66 = scmp.eq.s32.totalorder %s28, 3
      %p67 = por %p65, %p66
      %p68 = scmp.ne.s32.totalorder %s59, %s60
      %p69 = scmp.eq.s32.totalorder %s28, 0
      %p70 = por %p68, %p69
      %p71 = scmp.ne.s32.totalorder %s59, %s60
      %p72 = scmp.eq.s32.totalorder %s29, 3
      %p73 = por %p71, %p72
      %p75 = scmp.ne.s32.totalorder %s60, %s74
      %p76 = scmp.eq.s32.totalorder %s29, 0
      %p77 = por %p75, %p76
      %s79 = sadd.s32 %s78, 1
      %p82 = scmp.eq.s32.totalorder %s23, 3
      %p83 = scmp.ne.s32.totalorder %s78, %s80
      %p84 = scmp.eq.s32.totalorder %s23, 0
      %p85 = por %p83, %p84
      %p86 = scmp.ne.s32.totalorder %s78, %s80
      %p87 = scmp.eq.s32.totalorder %s28, 3
      %p88 = por %p86, %p87
      %p89 = scmp.ne.s32.totalorder %s80, %s81
      %p90 = scmp.eq.s32.totalorder %s28, 0
      %p91 = por %p89, %p90
      %p92 = scmp.ne.s32.totalorder %s80, %s81
      %p93 = scmp.eq.s32.totalorder %s29, 3
      %p94 = por %p92, %p93
      %p96 = scmp.ne.s32.totalorder %s81, %s95
      %p97 = scmp.eq.s32.totalorder %s29, 0
      %p98 = por %p96, %p97
      %s100 = sadd.s32 %s99, 1
      %p103 = scmp.eq.s32.totalorder %s23, 3
      %p104 = scmp.ne.s32.totalorder %s99, %s101
      %p105 = scmp.eq.s32.totalorder %s23, 0
      %p106 = por %p104, %p105
      %p107 = scmp.ne.s32.totalorder %s99, %s101
      %p108 = scmp.eq.s32.totalorder %s28, 3
      %p109 = por %p107, %p108
      %p110 = scmp.ne.s32.totalorder %s101, %s102
      %p111 = scmp.eq.s32.totalorder %s28, 0
      %p112 = por %p110, %p111
      %p113 = scmp.ne.s32.totalorder %s101, %s102
      %p114 = scmp.eq.s32.totalorder %s29, 3
      %p115 = por %p113, %p114
      %p117 = scmp.ne.s32.totalorder %s102, %s116
      %p118 = scmp.eq.s32.totalorder %s29, 0
      %p119 = por %p117, %p118
      %s121 = sadd.s32 %s120, 1
      %p124 = scmp.eq.s32.totalorder %s23, 3
      %p125 = scmp.ne.s32.totalorder %s120, %s122
      %p126 = scmp.eq.s32.totalorder %s23, 0
      %p127 = por %p125, %p126
      %p128 = scmp.ne.s32.totalorder %s120, %s122
      %p129 = scmp.eq.s32.totalorder %s28, 3
      %p130 = por %p128, %p129
      %p131 = scmp.ne.s32.totalorder %s122, %s123
      %p132 = scmp.eq.s32.totalorder %s28, 0
      %p133 = por %p131, %p132
      %p134 = scmp.ne.s32.totalorder %s122, %s123
      %p135 = scmp.eq.s32.totalorder %s29, 3
      %p136 = por %p134, %p135
      %p138 = scmp.ne.s32.totalorder %s123, %s137
      %p139 = scmp.eq.s32.totalorder %s29, 0
      %p140 = por %p138, %p139
      %s141 = ssub.s32 %s23, %s30
      %p142 = scmp.eq.s32.totalorder %s141, 0
      %s144 = sadd.s32 %s143, 1
      %s145 = scalar_select %p142, %s143, %s144
      %p148 = pneg %p142
      %p149 = scmp.eq.s32.totalorder %s23, 3
      %p150 = por %p148, %p149
      %p151 = scmp.ne.s32.totalorder %s143, %s146
      %p152 = scmp.eq.s32.totalorder %s23, 0
      %p153 = por %p151, %p152
      %p154 = scmp.ne.s32.totalorder %s143, %s146
      %p155 = scmp.eq.s32.totalorder %s28, 3
      %p156 = por %p154, %p155
      %p157 = scmp.ne.s32.totalorder %s146, %s147
      %p158 = scmp.eq.s32.totalorder %s28, 0
      %p159 = por %p157, %p158
      %p160 = scmp.ne.s32.totalorder %s146, %s147
      %p161 = scmp.eq.s32.totalorder %s29, 3
      %p162 = por %p160, %p161
      %p164 = scmp.ne.s32.totalorder %s147, %s163
      %p165 = scmp.eq.s32.totalorder %s29, 0
      %p166 = por %p164, %p165
      %p167 = scmp.le.s32.totalorder 1, %s23
      %p168 = scmp.lt.s32.totalorder %s23, 5
      %p169 = pnand %p167, %p168
      %p170 = pneg %p169
      // Predicated region
      $region9: #{tpu_custom_call.1} parent=5 // pred_check
        _
      $region10: #{tpu_custom_call.1} parent=5 // pred_check_branch
        %172 = sbr.rel (%p169) target = $region12
      $region11: #{tpu_custom_call.1} parent=5 // pred_region
        %s173 = ssub.s32 %s23, 1
        // Predicated region
        $region13: #{tpu_custom_call.1} parent=11 // pred_check
          %p174 = pneg %p70
        $region14: #{tpu_custom_call.1} parent=11 // pred_check_branch
          %176 = sbr.rel (%p174) target = $region16
        $region15: #{tpu_custom_call.1} parent=11 // pred_region
          %s178 = ssub.s32 512, 512
          %179 = vsyncadd [#allocation7], %s178
          %s180 = sshll.u32 [#allocation6], 4
          %s181 = int_to_ptr.vmem [resolvable:$true] %s180
          %186 = dma.hbm_to_vmem [thread:$0]  %s3, 512, %s181, [#allocation7], 128, 128, 8
        $region16: #{tpu_custom_call.1} parent=11 // pred_fallthru
          _
        // Predicated region
        $region17: #{tpu_custom_call.1} parent=11 // pred_check
          %p187 = pneg %p91
        $region18: #{tpu_custom_call.1} parent=11 // pred_check_branch
          %189 = sbr.rel (%p187) target = $region20
        $region19: #{tpu_custom_call.1} parent=11 // pred_region
          _
        $region20: #{tpu_custom_call.1} parent=11 // pred_fallthru
          _
        // Predicated region
        $region21: #{tpu_custom_call.1} parent=11 // pred_check
          %p190 = pneg %p112
        $region22: #{tpu_custom_call.1} parent=11 // pred_check_branch
          %192 = sbr.rel (%p190) target = $region24
        $region23: #{tpu_custom_call.1} parent=11 // pred_region
          _
        $region24: #{tpu_custom_call.1} parent=11 // pred_fallthru
          _
        // Predicated region
        $region25: #{tpu_custom_call.1} parent=11 // pred_check
          %p193 = pneg %p133
        $region26: #{tpu_custom_call.1} parent=11 // pred_check_branch
          %195 = sbr.rel (%p193) target = $region28
        $region27: #{tpu_custom_call.1} parent=11 // pred_region
          _
        $region28: #{tpu_custom_call.1} parent=11 // pred_fallthru
          _
      $region12: #{tpu_custom_call.1} parent=5 // pred_fallthru
        _
      %p196 = scmp.lt.s32.totalorder %s23, 4
      // Predicated region
      $region29: #{tpu_custom_call.1} parent=5 // pred_check
        %p197 = pneg %p196
      $region30: #{tpu_custom_call.1} parent=5 // pred_check_branch
        %199 = sbr.rel (%p197) target = $region32
      $region31: #{tpu_custom_call.1} parent=5 // pred_region
        // Predicated region
        $region33: #{tpu_custom_call.1} parent=31 // pred_check
          %p200 = pneg %p43
        $region34: #{tpu_custom_call.1} parent=31 // pred_check_branch
          %202 = sbr.rel (%p200) target = $region36
        $region35: #{tpu_custom_call.1} parent=31 // pred_region
          %s203 = smul.u32 2, %s23
          %p204 = scmp.lt.s32.totalorder %s203, 7
          %s205 = scalar_select %p204, %s203, 7
          %s206 = smul.addr %s205, 8
          %s207 = scalar_lea.vmem %s1, %s206
          %s208 = smul.u32 2, %s23
        $region36: #{tpu_custom_call.1} parent=31 // pred_fallthru
          _
      $region32: #{tpu_custom_call.1} parent=5 // pred_fallthru
        _
      %p209 = scmp.le.s32.totalorder 1, %s23
      %p210 = scmp.lt.s32.totalorder %s23, 5
      %p211 = pnand %p209, %p210
      %p212 = pneg %p211
      // Predicated region
      $region37: #{tpu_custom_call.1} parent=5 // pred_check
        _
      $region38: #{tpu_custom_call.1} parent=5 // pred_check_branch
        %214 = sbr.rel (%p211) target = $region40
      $region39: #{tpu_custom_call.1} parent=5 // pred_region
        %s215 = ssub.s32 %s23, 1
        // Predicated region
        $region41: #{tpu_custom_call.1} parent=39 // pred_check
          %p216 = pneg %p70
        $region42: #{tpu_custom_call.1} parent=39 // pred_check_branch
          %218 = sbr.rel (%p216) target = $region44
        $region43: #{tpu_custom_call.1} parent=39 // pred_region
          %219 = dma.done [#allocation7], 512
        $region44: #{tpu_custom_call.1} parent=39 // pred_fallthru
          _
        %s220 = smul.u32 2, %s28
        %p221 = scmp.lt.s32.totalorder %s220, 7
        %s222 = scalar_select %p221, %s220, 7
        %s223 = smul.addr %s222, 8
        %s224 = scalar_lea.vmem %s1, %s223
        %p225 = pneg %p49
        %p226 = pneg %p46
        %p227 = pneg %p70
        %p228 = pneg %p67
        %p229 = pneg %p91
        %p230 = pneg %p88
        %p231 = pneg %p112
        %p232 = pneg %p109
        %p233 = pneg %p133
        %p234 = pneg %p130
        %p235 = pneg %p159
        %p236 = pneg %p156
        %s237 = sand.u32 %s146, 1
        %s238 = scalar_lea.sflag [#allocation8], %s237
        %s239 = sand.u32 %s146, 1
        %s240 = smul.addr %s239, 16
        %s241 = scalar_lea.vmem [#allocation9], %s240
        %s242 = smul.u32 2, %s28
        %p243 = scmp.lt.s32.totalorder %s242, 7
        %s244 = scalar_select %p243, %s242, 7
        %s245 = smul.addr %s244, 8
        %s246 = scalar_lea.vmem %s1, %s245
        %s247 = smul.u32 2, %s28
        %s248 = smul.u32 2, %s28
        %s249 = smul.u32 %s28, 16
        loop: start=0, step=1, limit=16
        $region45: #{tpu_custom_call.1} parent=39 // loop_pre_header
          _
        $region46: #{tpu_custom_call.1} parent=39 // loop_header
          %s251 = sphi 0, %s255
          %p252 = scmp.ge.s32.totalorder %s251, 16
        $region47: #{tpu_custom_call.1} parent=39 // loop_header_branch
          %254 = sbr.rel (%p252) target = $region51
        $region48: #{tpu_custom_call.1} parent=39 // loop_body
          %s256 = sadd.s32 %s249, %s251
          %s257 = sld [smem:[#allocation5 + %s256]]
          %s258 = scalar_lea.vmem %s2, %s257
          %s259 = scalar_lea.vmem [#allocation2], %s251
          %p261 = scmp.lt.u32.totalorder 1, 8
          %p262 = pneg %p261
          // Predicated region
          $region52: #{tpu_custom_call.1} parent=48 // pred_check
            _
          $region53: #{tpu_custom_call.1} parent=48 // pred_check_branch
            %264 = sbr.rel (%p261) target = $region55
          $region54: #{tpu_custom_call.1} parent=48 // pred_region
            %s279 = sand.u32 1, 7
            %p280 = scmp.eq.s32.totalorder %s279, 0
            %p281 = pneg %p280
            // Predicated region
            $region67: #{tpu_custom_call.1} parent=54 // pred_check
              _
            $region68: #{tpu_custom_call.1} parent=54 // pred_check_branch
              %283 = sbr.rel (%p280) target = $region70
            $region69: #{tpu_custom_call.1} parent=54 // pred_region
              %s284 = sand.u32 1, 7
              %s285 = ssub.s32 1, %s284
              %s286 = scalar_lea.vmem %s258, %s285
              %s287 = ssub.s32 1, %s284
              %s288 = scalar_lea.vmem %s259, %s287 [#allocation2]
              %s289 = sshllo.u32 0, %s284
              loop: start=0, step=1, limit=1
              $region71: #{tpu_custom_call.1} parent=69 // loop_pre_header
                _
              $region72: #{tpu_custom_call.1} parent=69 // loop_header
                %s291 = sphi 0, %s295
                %p292 = scmp.ge.s32.totalorder %s291, 1
                %s296 = sphi %s286, %s286
                %s297 = sphi %s288, %s288
              $region73: #{tpu_custom_call.1} parent=69 // loop_header_branch
                %294 = sbr.rel (%p292) target = $region77
              $region74: #{tpu_custom_call.1} parent=69 // loop_body
                %v298 = vld [vmem:[%s296] sm:%s289]
                %299 = vst [vmem:[%s297] sm:%s289] %v298
              $region75: #{tpu_custom_call.1} parent=69 // loop_footer
                %s295 = sadd.s32 1, %s291
              $region76: #{tpu_custom_call.1} parent=69 // loop_footer_branch
                %290 = sbr.rel target = $region72
              $region77: #{tpu_custom_call.1} parent=69 // loop_exit
                _
            $region70: #{tpu_custom_call.1} parent=54 // pred_fallthru
              _
          $region55: #{tpu_custom_call.1} parent=48 // pred_fallthru
            _
          // Predicated region
          $region56: #{tpu_custom_call.1} parent=48 // pred_check
            %p265 = pneg %p261
          $region57: #{tpu_custom_call.1} parent=48 // pred_check_branch
            %267 = sbr.rel (%p265) target = $region59
          $region58: #{tpu_custom_call.1} parent=48 // pred_region
            %s268 = sshllo.u32 0, 1
            loop: start=0, step=1, limit=1
            $region60: #{tpu_custom_call.1} parent=58 // loop_pre_header
              _
            $region61: #{tpu_custom_call.1} parent=58 // loop_header
              %s270 = sphi 0, %s274
              %p271 = scmp.ge.s32.totalorder %s270, 1
              %s275 = sphi %s258, %s258
              %s276 = sphi %s259, %s259
            $region62: #{tpu_custom_call.1} parent=58 // loop_header_branch
              %273 = sbr.rel (%p271) target = $region66
            $region63: #{tpu_custom_call.1} parent=58 // loop_body
              %v277 = vld [vmem:[%s275] sm:%s268]
              %278 = vst [vmem:[%s276] sm:%s268] %v277
            $region64: #{tpu_custom_call.1} parent=58 // loop_footer
              %s274 = sadd.s32 1, %s270
            $region65: #{tpu_custom_call.1} parent=58 // loop_footer_branch
              %269 = sbr.rel target = $region61
            $region66: #{tpu_custom_call.1} parent=58 // loop_exit
              _
          $region59: #{tpu_custom_call.1} parent=48 // pred_fallthru
            _
          // Predicated region
          $region78: #{tpu_custom_call.1} parent=48 // pred_check
            _
          $region79: #{tpu_custom_call.1} parent=48 // pred_check_branch
            %302 = sbr.rel (0) target = $region81
          $region80: #{tpu_custom_call.1} parent=48 // pred_region
            %303 = vsyncadd [#allocation3], 16
          $region81: #{tpu_custom_call.1} parent=48 // pred_fallthru
            _
        $region49: #{tpu_custom_call.1} parent=39 // loop_footer
          %s255 = sadd.s32 1, %s251
        $region50: #{tpu_custom_call.1} parent=39 // loop_footer_branch
          %250 = sbr.rel target = $region46
        $region51: #{tpu_custom_call.1} parent=39 // loop_exit
          _
        loop: start=0, step=1, limit=16
        $region82: #{tpu_custom_call.1} parent=39 // loop_pre_header
          _
        $region83: #{tpu_custom_call.1} parent=39 // loop_header
          %s305 = sphi 0, %s309
          %p306 = scmp.ge.s32.totalorder %s305, 16
        $region84: #{tpu_custom_call.1} parent=39 // loop_header_branch
          %308 = sbr.rel (%p306) target = $region88
        $region85: #{tpu_custom_call.1} parent=39 // loop_body
          %s310 = smul.u32 1, 1
          %s311 = sshll.u32 %s310, 4
          %312 = dma.done [#allocation3], %s311
        $region86: #{tpu_custom_call.1} parent=39 // loop_footer
          %s309 = sadd.s32 1, %s305
        $region87: #{tpu_custom_call.1} parent=39 // loop_footer_branch
          %304 = sbr.rel target = $region83
        $region88: #{tpu_custom_call.1} parent=39 // loop_exit
          _
        %v313 = vld [vmem:[#allocation2] sm:$0xff]
        %v314 = vld [vmem:[#allocation2 + $0x8] sm:$0xff]
        %p315 = scmp.lt.s32.totalorder %s249, 0
        %s316 = ssub.s32 0, %s249
        %s317 = scalar_select %p315, %s316, %s249
        %s318 = sand.u32 %s317, 31
        %s319 = ssub.s32 0, %s318
        %s320 = scalar_select %p315, %s319, %s318
        %p321 = scmp.ne.s32.totalorder %s320, 0
        %p322 = scmp.lt.s32.totalorder %s320, 0
        %p323 = pnand %p322, %p321
        %p324 = pneg %p323
        %s325 = sadd.s32 %s320, 32
        %s326 = scalar_select %p324, %s325, %s320
        %s327 = scalar_lea.vmem [#allocation6], %s326
        %v328 = vld [vmem:[%s327] sm:$0xff]
        %v329 = vld [vmem:[%s327 + $0x8] sm:$0xff]
        %v330 = vadd.f32 %v313, %v328
        %v331 = vadd.f32 %v314, %v329
        %v332 = vld [vmem:[%s246] sm:$0xff]
        %v333 = vld [vmem:[%s246 + $0x8] sm:$0xff]
        %v334 = vld [vmem:[%s4] sm:$0x1]
        %vm335 = vcmp.eq.s32.totalorder %v332, 0
        %vm336 = vcmp.eq.s32.totalorder %v333, 0
        %v337 = vsel %vm335, 1, 0
        %v338 = vsel %vm336, 1, 0
        %v339 = vcvt.s32.f32 %v337
        %v340 = vcvt.s32.f32 %v338
        %342 = vset.pattern.permute.xlu0 0
        %343 = vperm.xlu0 %342, %v339
        %v344 = vpop.permute.xlu0 %343
        %347 = vset.pattern.permute.xlu0 0
        %348 = vperm.xlu0 %347, %v340
        %v349 = vpop.permute.xlu0 %348
        %v351 = vlaneseq
        %v352 = vshrl.u32 %v351, 7
        %v353 = vsub.s32 0, %v352
        %v354 = vrot.slane %v334, %v353
        %v355 = vmul.f32 %v344, %v354
        %v356 = vmul.f32 %v349, %v354
        %v357 = vadd.f32 %v330, %v355
        %v358 = vadd.f32 %v331, %v356
        %v359 = vld [vmem:[%s4 + $0x1] sm:$0x1]
        %vm360 = vcmp.eq.s32.totalorder %v332, 1
        %vm361 = vcmp.eq.s32.totalorder %v333, 1
        %v362 = vsel %vm360, 1, 0
        %v363 = vsel %vm361, 1, 0
        %v364 = vcvt.s32.f32 %v362
        %v365 = vcvt.s32.f32 %v363
        %367 = vset.pattern.permute.xlu0 0
        %368 = vperm.xlu0 %367, %v364
        %v369 = vpop.permute.xlu0 %368
        %372 = vset.pattern.permute.xlu0 0
        %373 = vperm.xlu0 %372, %v365
        %v374 = vpop.permute.xlu0 %373
        %v376 = vlaneseq
        %v377 = vshrl.u32 %v376, 7
        %v378 = vsub.s32 0, %v377
        %v379 = vrot.slane %v359, %v378
        %v380 = vmul.f32 %v369, %v379
        %v381 = vmul.f32 %v374, %v379
        %v382 = vadd.f32 %v357, %v380
        %v383 = vadd.f32 %v358, %v381
        %384 = vadd.xlane.f32.xlu0 %v382
        %v385 = vpop.xlane.xlu0 %384
        %386 = vadd.xlane.f32.xlu0 %v383
        %v387 = vpop.xlane.xlu0 %386
        %v388 = vmul.f32 %v385, 0.0078125
        %v389 = vmul.f32 %v387, 0.0078125
        %v390 = vmul.f32 %v382, %v382
        %v391 = vmul.f32 %v383, %v383
        %392 = vadd.xlane.f32.xlu0 %v390
        %v393 = vpop.xlane.xlu0 %392
        %394 = vadd.xlane.f32.xlu0 %v391
        %v395 = vpop.xlane.xlu0 %394
        %v396 = vmul.f32 %v393, 0.0078125
        %v397 = vmul.f32 %v395, 0.0078125
        %v398 = vmul.f32 %v388, %v388
        %v399 = vmul.f32 %v389, %v389
        %v400 = vsub.f32 %v396, %v398
        %v401 = vsub.f32 %v397, %v399
        %v402 = vadd.f32 %v400, 1e-12
        %v403 = vadd.f32 %v401, 1e-12
        %v404 = vrsqrt.pop %v402
        %v405 = vrsqrt.pop %v403
        %v406 = vld [vmem:[%s5] sm:$0x1]
        %v407 = vld [vmem:[%s6] sm:$0x1]
        %v408 = vsub.f32 %v382, %v388
        %v409 = vsub.f32 %v383, %v389
        %v410 = vmul.f32 %v408, %v404
        %v411 = vmul.f32 %v409, %v405
        %v413 = vlaneseq
        %v414 = vshrl.u32 %v413, 7
        %v415 = vsub.s32 0, %v414
        %v416 = vrot.slane %v406, %v415
        %v418 = vmul.f32 %v410, %v416
        %v419 = vmul.f32 %v411, %v416
        %v421 = vlaneseq
        %v422 = vshrl.u32 %v421, 7
        %v423 = vsub.s32 0, %v422
        %v424 = vrot.slane %v407, %v423
        %v426 = vadd.f32 %v418, %v424
        %v427 = vadd.f32 %v419, %v424
        %428 = vst [vmem:[%s241] sm:$0xff] %v426
        %429 = vst [vmem:[%s241 + $0x8] sm:$0xff] %v427
        %s430 = sand.u32 %s146, 1
        %s431 = scalar_lea.sflag [#allocation8], %s430
        %s432 = sand.u32 %s146, 1
        %s433 = smul.addr %s432, 16
        %s434 = scalar_lea.vmem [#allocation9], %s433
        // Predicated region
        $region89: #{tpu_custom_call.1} parent=39 // pred_check
          %p435 = pneg %p156
        $region90: #{tpu_custom_call.1} parent=39 // pred_check_branch
          %437 = sbr.rel (%p435) target = $region92
        $region91: #{tpu_custom_call.1} parent=39 // pred_region
          %s438 = smul.u32 2, %s28
          %s440 = ssub.s32 256, 256
          %441 = vsyncadd %s431, %s440
          %s442 = smul.addr %s438, 128
          %s443 = scalar_lea.hbm %s7, %s442
          %s444 = sshll.u32 %s434, 4
          %s445 = int_to_ptr.vmem [resolvable:$true] %s444
          %450 = dma.vmem_to_hbm [thread:$0]  %s445, 256, %s443, %s431, 128, 128, 8
        $region92: #{tpu_custom_call.1} parent=39 // pred_fallthru
          _
      $region40: #{tpu_custom_call.1} parent=5 // pred_fallthru
        _
      %p451 = scmp.le.s32.totalorder 2, %s23
      // Predicated region
      $region93: #{tpu_custom_call.1} parent=5 // pred_check
        %p452 = pneg %p451
      $region94: #{tpu_custom_call.1} parent=5 // pred_check_branch
        %454 = sbr.rel (%p452) target = $region96
      $region95: #{tpu_custom_call.1} parent=5 // pred_region
        %s455 = ssub.s32 %s23, 2
        // Predicated region
        $region97: #{tpu_custom_call.1} parent=95 // pred_check
          %p456 = pneg %p162
        $region98: #{tpu_custom_call.1} parent=95 // pred_check_branch
          %458 = sbr.rel (%p456) target = $region100
        $region99: #{tpu_custom_call.1} parent=95 // pred_region
          %s459 = sand.u32 %s147, 1
          %s460 = scalar_lea.sflag [#allocation8], %s459
          %s461 = sand.u32 %s147, 1
          %s462 = smul.addr %s461, 16
          %s463 = scalar_lea.vmem [#allocation9], %s462
          %464 = dma.done %s460, 256
        $region100: #{tpu_custom_call.1} parent=95 // pred_fallthru
          _
      $region96: #{tpu_custom_call.1} parent=5 // pred_fallthru
        _
    $region6: #{tpu_custom_call.1} parent=1 // loop_footer
      %s27 = sadd.s32 1, %s23
    $region7: #{tpu_custom_call.1} parent=1 // loop_footer_branch
      %22 = sbr.rel target = $region3
    $region8: #{tpu_custom_call.1} parent=1 // loop_exit
      _
    %465 = vsyncpa [#allocation7], 1
    %s466 = scalar_lea.sflag [#allocation7], 1
    %467 = vsyncpa %s466, 1
    %468 = vsyncpa [#allocation8], 1
    %s469 = scalar_lea.sflag [#allocation8], 1
    %470 = vsyncpa %s469, 1
  %471 = vsyncmov [#allocation3]
  %s472 = vpop.sfrf %471
  %p473 = scmp.eq.s32.totalorder %s472, 0
  %p474 = pneg %p473
  %476 = shalt.err (%p474)

</llo_original>
